<compile_context>
chip_gen: v7x
topology: tpu7x:2x2x1
jax: 0.10.0
libtpu: 0.0.40
codegen_flags: <defaults>
</compile_context>

<pallas_src>
import functools

import jax
import jax.numpy as jnp
from jax.experimental import pallas as pl
from jax.experimental.pallas import tpu as pltpu


def _res_block_kernel(x_ref, w1_ref, b1_ref, w2_ref, b2_ref, o_ref,
                      xpad_ref, y1pad_ref, *, H, BT):
    """Fused res-block for a batch tile of BT images.

    x_ref    : (BT, H, W*Cin)      bf16 lane-dense packed rows
    w1_ref   : (3*W*Cin, W*Cout)   bf16 banded conv1 weights (BN1 scale folded)
    b1_ref   : (1, W*Cout)         f32 folded BN1 bias (tiled per lane)
    w2_ref   : (3*W*Cout, W*Cout)  bf16 banded conv2 weights (BN2 scale folded)
    b2_ref   : (1, W*Cout)         f32 folded BN2 bias
    o_ref    : (BT, H, W*Cout)     bf16 output
    xpad_ref : (BT, H+2, W*Cin)    bf16 scratch, 1-row zero halo per image
    y1pad_ref: (BT, H+2, W*Cout)   bf16 scratch, 1-row zero halo per image
    """
    f32 = jnp.float32
    WCin = xpad_ref.shape[2]
    WCout = y1pad_ref.shape[2]
    M = BT * H

    # Zero only the 2*BT halo rows (interior is fully overwritten below).
    # Done every step so correctness never depends on scratch persistence.
    xpad_ref[:, pl.ds(0, 1), :] = jnp.zeros((BT, 1, WCin), xpad_ref.dtype)
    xpad_ref[:, pl.ds(H + 1, 1), :] = jnp.zeros((BT, 1, WCin), xpad_ref.dtype)
    y1pad_ref[:, pl.ds(0, 1), :] = jnp.zeros((BT, 1, WCout), y1pad_ref.dtype)
    y1pad_ref[:, pl.ds(H + 1, 1), :] = jnp.zeros((BT, 1, WCout), y1pad_ref.dtype)

    # ---- conv1 (+ folded BN1 scale): one batched interior store, then the
    # three dh taps folded into K = 3*W*Cin for a single M = BT*H matmul.
    xv = x_ref[...]                                          # (BT, H, WCin)
    xpad_ref[:, pl.ds(1, H), :] = xv
    x_c = xv.reshape(M, WCin)                                # dh=1 (center)
    x_u = xpad_ref[:, pl.ds(0, H), :].reshape(M, WCin)       # dh=0 (row h-1)
    x_d = xpad_ref[:, pl.ds(2, H), :].reshape(M, WCin)       # dh=2 (row h+1)
    lhs1 = jnp.concatenate([x_u, x_c, x_d], axis=-1)         # (M, 3*WCin)
    acc = jnp.dot(lhs1, w1_ref[...], preferred_element_type=f32)

    # ---- bn1 bias + relu1
    y1 = jnp.maximum(acc + b1_ref[...], 0.0)                 # (M, WCout) f32
    y1_bf = y1.astype(y1pad_ref.dtype)

    # ---- conv2 (+ folded BN2 scale): same K-folded single matmul.
    y1pad_ref[:, pl.ds(1, H), :] = y1_bf.reshape(BT, H, WCout)
    y_u = y1pad_ref[:, pl.ds(0, H), :].reshape(M, WCout)
    y_d = y1pad_ref[:, pl.ds(2, H), :].reshape(M, WCout)
    lhs2 = jnp.concatenate([y_u, y1_bf, y_d], axis=-1)       # (M, 3*WCout)
    acc2 = jnp.dot(lhs2, w2_ref[...], preferred_element_type=f32)

    # ---- bn2 bias + residual add + relu, lane-dense bf16 store
    out = jnp.maximum(acc2 + b2_ref[...] + x_c.astype(f32), 0.0)
    o_ref[...] = out.reshape(BT, H, WCout).astype(o_ref.dtype)


def _band_conv_weights(w_hwio, scale, W):
    """Fold BN scale into a 3x3 conv and repack as banded (3*W*Cin, W*Cout).

    out_row[h] = concat_dh(in_row_pad[h + dh]) @ M, with rows packed as (W*C);
    the dw taps AND the W zero-padding live in the band structure of M.
    """
    w = w_hwio.astype(jnp.float32) * scale[None, None, None, :]
    mats = []
    for dh in range(3):
        m = 0.0
        for dw in range(3):
            # nonzero where w_in == w_out + dw - 1 (out-of-range == W-padding)
            sel = jnp.eye(W, k=-(dw - 1), dtype=jnp.float32)
            m = m + jnp.kron(sel, w[dh, dw])
        mats.append(m)
    mats = jnp.stack(mats)                     # (3, W*Cin, W*Cout)
    return mats.reshape(-1, mats.shape[-1]).astype(jnp.bfloat16)


def _pick_batch_tile(n, h):
    """Pick images-per-step so M = bt*h lands in ~[128, 512].

    Fills the MXU rows and amortizes per-grid-step pipeline overhead; prefers
    >= 2 grid steps so both v7x TensorCores get work when the batch allows.
    """
    divs = [d for d in range(1, n + 1) if n % d == 0]
    for lo in (256, 128):
        cands = [d for d in divs if lo <= d * h <= 512 and n // d >= 2]
        if cands:
            return min(cands)
    cands = [d for d in divs if d * h <= 512]
    return max(cands) if cands else 1


def basic_res_block_pallas(x_nchw, params):
    """Forward pass of basic_res_block (downsample=None, stride=1 => Cin==Cout)."""
    N, C, H, W = x_nchw.shape
    Cin = Cout = C
    WCin, WCout = W * Cin, W * Cout
    eps = 1e-5

    # TODO(synk): large W*C needs an im2col (K=9*Cin) + spatially tiled path;
    # the banded-weight trick below targets the small-channel CRNN regime.
    assert WCin <= 512, "banded-weight path is sized for small W*C"
    # TODO(synk): stride != 1 / downsample projection path not implemented.

    # Fold BN (inference mode) into per-channel scale/bias; scale goes into
    # the conv weights, only the bias is added in-kernel.
    def fold_bn(gamma, beta, mean, var):
        scale = gamma / jnp.sqrt(var + eps)
        bias = beta - mean * scale
        return scale, bias

    s1, b1 = fold_bn(params["bn1_gamma"], params["bn1_beta"],
                     params["bn1_mean"], params["bn1_var"])
    s2, b2 = fold_bn(params["bn2_gamma"], params["bn2_beta"],
                     params["bn2_mean"], params["bn2_var"])

    w1 = _band_conv_weights(params["w1"], s1, W)          # (3*W*Cin, W*Cout)
    w2 = _band_conv_weights(params["w2"], s2, W)          # (3*W*Cout, W*Cout)
    b1_lane = jnp.tile(b1, W).reshape(1, WCout).astype(jnp.float32)
    b2_lane = jnp.tile(b2, W).reshape(1, WCout).astype(jnp.float32)

    # NCHW -> (N, H, W*C) bf16.  No host-side spatial padding (halo handled in
    # the kernel / band weights); bf16 halves activation HBM traffic.
    # TODO(synk): in a full CRNN, keep NHWC/bf16 end-to-end and drop the
    # wrapper-side NCHW<->NHWC transposes (they are extra HBM passes in XLA).
    x_rows = jnp.transpose(x_nchw, (0, 2, 3, 1)).reshape(N, H, WCin)
    x_rows = x_rows.astype(jnp.bfloat16)

    bt = _pick_batch_tile(N, H)
    kernel = functools.partial(_res_block_kernel, H=H, BT=bt)

    # VMEM budget: double-buffered in/out blocks + weights + biases + scratch.
    vmem_need = (
        2 * bt * H * WCin * 2            # input blocks (bf16, 2 buffers)
        + 2 * bt * H * WCout * 2         # output blocks (bf16, 2 buffers)
        + 2 * 3 * WCin * WCout * 2       # conv1 banded weights
        + 2 * 3 * WCout * WCout * 2      # conv2 banded weights
        + 2 * 2 * WCout * 4              # biases
        + bt * (H + 2) * (WCin + WCout) * 2   # halo scratch
    )
    vmem_limit = int(min(64 << 20, max(16 << 20, 2 * vmem_need)))

    out_rows = pl.pallas_call(
        kernel,
        out_shape=jax.ShapeDtypeStruct((N, H, WCout), jnp.bfloat16),
        grid_spec=pltpu.PrefetchScalarGridSpec(
            num_scalar_prefetch=0,
            grid=(N // bt,),
            in_specs=[
                pl.BlockSpec((bt, H, WCin), lambda i: (i, 0, 0)),
                pl.BlockSpec((3 * WCin, WCout), lambda i: (0, 0)),
                pl.BlockSpec((1, WCout), lambda i: (0, 0)),
                pl.BlockSpec((3 * WCout, WCout), lambda i: (0, 0)),
                pl.BlockSpec((1, WCout), lambda i: (0, 0)),
            ],
            out_specs=pl.BlockSpec((bt, H, WCout), lambda i: (i, 0, 0)),
            scratch_shapes=[
                pltpu.VMEM((bt, H + 2, WCin), jnp.bfloat16),   # padded input
                pltpu.VMEM((bt, H + 2, WCout), jnp.bfloat16),  # padded conv1 act
            ],
        ),
        compiler_params=pltpu.CompilerParams(
            dimension_semantics=("parallel",),
            vmem_limit_bytes=vmem_limit,
        ),
    )(x_rows, w1, b1_lane, w2, b2_lane)

    # (N, H, W*Cout) -> NCHW, cast back to the module's interface dtype.
    out = jnp.transpose(out_rows.reshape(N, H, W, Cout), (0, 3, 1, 2))
    return out.astype(x_nchw.dtype)


def basic_res_block_ref(x_nchw, params):
    """Pure-JAX f32 reference (module semantics) for verification."""
    eps = 1e-5
    x = jnp.transpose(x_nchw, (0, 2, 3, 1)).astype(jnp.float32)  # NHWC

    def conv3x3(x_nhwc, w_hwio):
        return jax.lax.conv_general_dilated(
            x_nhwc, w_hwio, window_strides=(1, 1),
            padding=((1, 1), (1, 1)),
            dimension_numbers=("NHWC", "HWIO", "NHWC"))

    def bn(y, gamma, beta, mean, var):
        return (y - mean) / jnp.sqrt(var + eps) * gamma + beta

    y = conv3x3(x, params["w1"])
    y = bn(y, params["bn1_gamma"], params["bn1_beta"],
           params["bn1_mean"], params["bn1_var"])
    y = jnp.maximum(y, 0.0)
    y = conv3x3(y, params["w2"])
    y = bn(y, params["bn2_gamma"], params["bn2_beta"],
           params["bn2_mean"], params["bn2_var"])
    y = jnp.maximum(y + x, 0.0)
    return jnp.transpose(y, (0, 3, 1, 2))


def make_params(key, c):
    ks = jax.random.split(key, 8)
    return {
        # conv weights in HWIO layout (3,3,Cin,Cout); bias=False as in conv3x3.
        "w1": jax.random.normal(ks[0], (3, 3, c, c), jnp.float32) * 0.1,
        "w2": jax.random.normal(ks[1], (3, 3, c, c), jnp.float32) * 0.1,
        "bn1_gamma": 1.0 + 0.1 * jax.random.normal(ks[2], (c,), jnp.float32),
        "bn1_beta": 0.1 * jax.random.normal(ks[3], (c,), jnp.float32),
        "bn1_mean": 0.1 * jax.random.normal(ks[4], (c,), jnp.float32),
        "bn1_var": 1.0 + 0.1 * jax.random.uniform(ks[5], (c,), jnp.float32),
        "bn2_gamma": 1.0 + 0.1 * jax.random.normal(ks[6], (c,), jnp.float32),
        "bn2_beta": 0.1 * jax.random.normal(ks[7], (c,), jnp.float32),
        "bn2_mean": jnp.zeros((c,), jnp.float32),
        "bn2_var": jnp.ones((c,), jnp.float32),
    }
    # TODO(synk): training-mode BatchNorm (batch statistics) not implemented;
    # inference-mode (running stats) semantics are used.


if __name__ == "__main__":
    N, C, H, W = 2, 8, 16, 16  # downsample=None & stride=1 => nIn == nOut
    key = jax.random.PRNGKey(0)
    kx, kp = jax.random.split(key)
    x = jax.random.normal(kx, (N, C, H, W), jnp.float32)
    params = make_params(kp, C)

    out = basic_res_block_pallas(x, params)
    out = jax.block_until_ready(out)

    ref = basic_res_block_ref(x, params)
    assert out.shape == (N, C, H, W)
    err = float(jnp.max(jnp.abs(out - ref)))
    # bf16 matmul operands / activations / output => bf16-level tolerance.
    assert jnp.allclose(out, ref, atol=5e-2, rtol=5e-2), f"max abs err {err}"
    print("KERNEL_OK")
</pallas_src>

<mosaic_0001>
module attributes {stable_mosaic.version = 11 : i64} {
  func.func @_res_block_kernel(%arg0: i32, %arg1: memref<2x16x128xbf16, #tpu.memory_space<vmem>>, %arg2: memref<384x128xbf16, #tpu.memory_space<vmem>>, %arg3: memref<1x128xf32, #tpu.memory_space<vmem>>, %arg4: memref<384x128xbf16, #tpu.memory_space<vmem>>, %arg5: memref<1x128xf32, #tpu.memory_space<vmem>>, %arg6: memref<2x16x128xbf16, #tpu.memory_space<vmem>>, %arg7: memref<2x18x128xbf16, #tpu.memory_space<vmem>>, %arg8: memref<2x18x128xbf16, #tpu.memory_space<vmem>>) attributes {dimension_semantics = [#tpu.dimension_semantics<parallel>], iteration_bounds = array<i64: 1>, scalar_prefetch = 0 : i64, scratch_operands = 2 : i64, tpu.core_type = #tpu.core_type<tc>, window_params = [{transform_indices = @transform_0, window_bounds = array<i64: 2, 16, 128>}, {pipeline_mode = #tpu.pipeline_mode<synchronous>, transform_indices = @transform_1, window_bounds = array<i64: 384, 128>}, {pipeline_mode = #tpu.pipeline_mode<synchronous>, transform_indices = @transform_2, window_bounds = array<i64: 1, 128>}, {pipeline_mode = #tpu.pipeline_mode<synchronous>, transform_indices = @transform_3, window_bounds = array<i64: 384, 128>}, {pipeline_mode = #tpu.pipeline_mode<synchronous>, transform_indices = @transform_4, window_bounds = array<i64: 1, 128>}, {transform_indices = @transform_5, window_bounds = array<i64: 2, 16, 128>}]} {
    %cst = arith.constant 0.000000e+00 : bf16
    %0 = vector.broadcast %cst : bf16 to vector<2x1x128xbf16>
    %c0 = arith.constant 0 : index
    %c0_0 = arith.constant 0 : index
    %c0_1 = arith.constant 0 : index
    %1 = vector.load %arg7[%c0, %c0_0, %c0_1] : memref<2x18x128xbf16, #tpu.memory_space<vmem>>, vector<2x1x128xbf16>
    tpu.vector_store %arg7[%c0, %c0_0, %c0_1], %0 {strides = array<i32>} : memref<2x18x128xbf16, #tpu.memory_space<vmem>>, vector<2x1x128xbf16>,
    %cst_2 = arith.constant 0.000000e+00 : bf16
    %2 = vector.broadcast %cst_2 : bf16 to vector<2x1x128xbf16>
    %c0_3 = arith.constant 0 : index
    %c17 = arith.constant 17 : index
    %c0_4 = arith.constant 0 : index
    %3 = vector.load %arg7[%c0_3, %c17, %c0_4] : memref<2x18x128xbf16, #tpu.memory_space<vmem>>, vector<2x1x128xbf16>
    tpu.vector_store %arg7[%c0_3, %c17, %c0_4], %2 {strides = array<i32>} : memref<2x18x128xbf16, #tpu.memory_space<vmem>>, vector<2x1x128xbf16>,
    %cst_5 = arith.constant 0.000000e+00 : bf16
    %4 = vector.broadcast %cst_5 : bf16 to vector<2x1x128xbf16>
    %c0_6 = arith.constant 0 : index
    %c0_7 = arith.constant 0 : index
    %c0_8 = arith.constant 0 : index
    %5 = vector.load %arg8[%c0_6, %c0_7, %c0_8] : memref<2x18x128xbf16, #tpu.memory_space<vmem>>, vector<2x1x128xbf16>
    tpu.vector_store %arg8[%c0_6, %c0_7, %c0_8], %4 {strides = array<i32>} : memref<2x18x128xbf16, #tpu.memory_space<vmem>>, vector<2x1x128xbf16>,
    %cst_9 = arith.constant 0.000000e+00 : bf16
    %6 = vector.broadcast %cst_9 : bf16 to vector<2x1x128xbf16>
    %c0_10 = arith.constant 0 : index
    %c17_11 = arith.constant 17 : index
    %c0_12 = arith.constant 0 : index
    %7 = vector.load %arg8[%c0_10, %c17_11, %c0_12] : memref<2x18x128xbf16, #tpu.memory_space<vmem>>, vector<2x1x128xbf16>
    tpu.vector_store %arg8[%c0_10, %c17_11, %c0_12], %6 {strides = array<i32>} : memref<2x18x128xbf16, #tpu.memory_space<vmem>>, vector<2x1x128xbf16>,
    %c0_13 = arith.constant 0 : index
    %c0_14 = arith.constant 0 : index
    %c0_15 = arith.constant 0 : index
    %8 = vector.load %arg1[%c0_13, %c0_14, %c0_15] : memref<2x16x128xbf16, #tpu.memory_space<vmem>>, vector<2x16x128xbf16>
    %c0_16 = arith.constant 0 : index
    %c1 = arith.constant 1 : index
    %c0_17 = arith.constant 0 : index
    %9 = vector.load %arg7[%c0_16, %c1, %c0_17] : memref<2x18x128xbf16, #tpu.memory_space<vmem>>, vector<2x16x128xbf16>
    tpu.vector_store %arg7[%c0_16, %c1, %c0_17], %8 {strides = array<i32>} : memref<2x18x128xbf16, #tpu.memory_space<vmem>>, vector<2x16x128xbf16>,
    %10 = vector.shape_cast %8 : vector<2x16x128xbf16> to vector<32x128xbf16>
    %c0_18 = arith.constant 0 : index
    %c0_19 = arith.constant 0 : index
    %c0_20 = arith.constant 0 : index
    %11 = vector.load %arg7[%c0_18, %c0_19, %c0_20] : memref<2x18x128xbf16, #tpu.memory_space<vmem>>, vector<2x16x128xbf16>
    %12 = vector.shape_cast %11 : vector<2x16x128xbf16> to vector<32x128xbf16>
    %c0_21 = arith.constant 0 : index
    %c2 = arith.constant 2 : index
    %c0_22 = arith.constant 0 : index
    %13 = vector.load %arg7[%c0_21, %c2, %c0_22] : memref<2x18x128xbf16, #tpu.memory_space<vmem>>, vector<2x16x128xbf16>
    %14 = vector.shape_cast %13 : vector<2x16x128xbf16> to vector<32x128xbf16>
    %15 = tpu.concatenate %12, %10, %14 in 1 : vector<32x128xbf16>, vector<32x128xbf16>, vector<32x128xbf16> -> vector<32x384xbf16>
    %c0_23 = arith.constant 0 : index
    %c0_24 = arith.constant 0 : index
    %16 = vector.load %arg2[%c0_23, %c0_24] : memref<384x128xbf16, #tpu.memory_space<vmem>>, vector<384x128xbf16>
    %cst_25 = arith.constant dense<0.000000e+00> : vector<32x128xf32>
    %17 = tpu.matmul %15, %16, %cst_25 {dimension_numbers = #tpu.dot_dimension_numbers<[1], [0], [0], [1], [0, 0, 1, 1], [], []>} : vector<32x384xbf16>, vector<384x128xbf16>, vector<32x128xf32> -> vector<32x128xf32>
    %c0_26 = arith.constant 0 : index
    %c0_27 = arith.constant 0 : index
    %18 = vector.load %arg3[%c0_26, %c0_27] : memref<1x128xf32, #tpu.memory_space<vmem>>, vector<1x128xf32>
    %19 = vector.broadcast %18 : vector<1x128xf32> to vector<32x128xf32>
    %20 = arith.addf %17, %19 : vector<32x128xf32>
    %cst_28 = arith.constant 0.000000e+00 : f32
    %21 = vector.broadcast %cst_28 : f32 to vector<32x128xf32>
    %22 = arith.maximumf %20, %21 : vector<32x128xf32>
    %23 = arith.truncf %22 : vector<32x128xf32> to vector<32x128xbf16>
    %24 = vector.shape_cast %23 : vector<32x128xbf16> to vector<2x16x128xbf16>
    %c0_29 = arith.constant 0 : index
    %c1_30 = arith.constant 1 : index
    %c0_31 = arith.constant 0 : index
    %25 = vector.load %arg8[%c0_29, %c1_30, %c0_31] : memref<2x18x128xbf16, #tpu.memory_space<vmem>>, vector<2x16x128xbf16>
    tpu.vector_store %arg8[%c0_29, %c1_30, %c0_31], %24 {strides = array<i32>} : memref<2x18x128xbf16, #tpu.memory_space<vmem>>, vector<2x16x128xbf16>,
    %c0_32 = arith.constant 0 : index
    %c0_33 = arith.constant 0 : index
    %c0_34 = arith.constant 0 : index
    %26 = vector.load %arg8[%c0_32, %c0_33, %c0_34] : memref<2x18x128xbf16, #tpu.memory_space<vmem>>, vector<2x16x128xbf16>
    %27 = vector.shape_cast %26 : vector<2x16x128xbf16> to vector<32x128xbf16>
    %c0_35 = arith.constant 0 : index
    %c2_36 = arith.constant 2 : index
    %c0_37 = arith.constant 0 : index
    %28 = vector.load %arg8[%c0_35, %c2_36, %c0_37] : memref<2x18x128xbf16, #tpu.memory_space<vmem>>, vector<2x16x128xbf16>
    %29 = vector.shape_cast %28 : vector<2x16x128xbf16> to vector<32x128xbf16>
    %30 = tpu.concatenate %27, %23, %29 in 1 : vector<32x128xbf16>, vector<32x128xbf16>, vector<32x128xbf16> -> vector<32x384xbf16>
    %c0_38 = arith.constant 0 : index
    %c0_39 = arith.constant 0 : index
    %31 = vector.load %arg4[%c0_38, %c0_39] : memref<384x128xbf16, #tpu.memory_space<vmem>>, vector<384x128xbf16>
    %cst_40 = arith.constant dense<0.000000e+00> : vector<32x128xf32>
    %32 = tpu.matmul %30, %31, %cst_40 {dimension_numbers = #tpu.dot_dimension_numbers<[1], [0], [0], [1], [0, 0, 1, 1], [], []>} : vector<32x384xbf16>, vector<384x128xbf16>, vector<32x128xf32> -> vector<32x128xf32>
    %c0_41 = arith.constant 0 : index
    %c0_42 = arith.constant 0 : index
    %33 = vector.load %arg5[%c0_41, %c0_42] : memref<1x128xf32, #tpu.memory_space<vmem>>, vector<1x128xf32>
    %34 = vector.broadcast %33 : vector<1x128xf32> to vector<32x128xf32>
    %35 = arith.addf %32, %34 : vector<32x128xf32>
    %36 = arith.extf %10 : vector<32x128xbf16> to vector<32x128xf32>
    %37 = arith.addf %35, %36 : vector<32x128xf32>
    %cst_43 = arith.constant 0.000000e+00 : f32
    %38 = vector.broadcast %cst_43 : f32 to vector<32x128xf32>
    %39 = arith.maximumf %37, %38 : vector<32x128xf32>
    %40 = vector.shape_cast %39 : vector<32x128xf32> to vector<2x16x128xf32>
    %41 = arith.truncf %40 : vector<2x16x128xf32> to vector<2x16x128xbf16>
    %c0_44 = arith.constant 0 : index
    %c0_45 = arith.constant 0 : index
    %c0_46 = arith.constant 0 : index
    %42 = vector.load %arg6[%c0_44, %c0_45, %c0_46] : memref<2x16x128xbf16, #tpu.memory_space<vmem>>, vector<2x16x128xbf16>
    tpu.vector_store %arg6[%c0_44, %c0_45, %c0_46], %41 {strides = array<i32>} : memref<2x16x128xbf16, #tpu.memory_space<vmem>>, vector<2x16x128xbf16>,
    return
  }
  func.func @transform_0(%arg0: i32) -> (i32, i32, i32) {
    %c0_i32 = arith.constant 0 : i32
    %c0_i32_0 = arith.constant 0 : i32
    %c0_i32_1 = arith.constant 0 : i32
    return %arg0, %c0_i32, %c0_i32_0 : i32, i32, i32
  }
  func.func @transform_1(%arg0: i32) -> (i32, i32) {
    %c0_i32 = arith.constant 0 : i32
    %c0_i32_0 = arith.constant 0 : i32
    %c0_i32_1 = arith.constant 0 : i32
    return %c0_i32, %c0_i32_0 : i32, i32
  }
  func.func @transform_2(%arg0: i32) -> (i32, i32) {
    %c0_i32 = arith.constant 0 : i32
    %c0_i32_0 = arith.constant 0 : i32
    %c0_i32_1 = arith.constant 0 : i32
    return %c0_i32, %c0_i32_0 : i32, i32
  }
  func.func @transform_3(%arg0: i32) -> (i32, i32) {
    %c0_i32 = arith.constant 0 : i32
    %c0_i32_0 = arith.constant 0 : i32
    %c0_i32_1 = arith.constant 0 : i32
    return %c0_i32, %c0_i32_0 : i32, i32
  }
  func.func @transform_4(%arg0: i32) -> (i32, i32) {
    %c0_i32 = arith.constant 0 : i32
    %c0_i32_0 = arith.constant 0 : i32
    %c0_i32_1 = arith.constant 0 : i32
    return %c0_i32, %c0_i32_0 : i32, i32
  }
  func.func @transform_5(%arg0: i32) -> (i32, i32, i32) {
    %c0_i32 = arith.constant 0 : i32
    %c0_i32_0 = arith.constant 0 : i32
    %c0_i32_1 = arith.constant 0 : i32
    return %arg0, %c0_i32, %c0_i32_0 : i32, i32, i32
  }
}

</mosaic_0001>

<llo_original>
// kernel: tpu_custom_call.1
$region0: #{tpu_custom_call.1}
  #allocation0 [shape = 'u32[]', space=smem, size = 0x4, offset = 0x4, fixed_abs, tag = 'smem constant byte address 0x4 - core index']
  #allocation1 [shape = 'u32[144,128]{1,0:T(1,128)}', space=vmem, size = 0x12000, scoped, tag = 'internal scratch']
  #allocation2 [shape = 'bf16[2,18,128]{2,1,0:T(8,128)(2,1)}', space=vmem, size = 0x3000, scoped, tag = 'scratch operand']
  #allocation3 [shape = 'bf16[2,18,128]{2,1,0:T(8,128)(2,1)}', space=vmem, size = 0x3000, scoped, tag = 'scratch operand']
  %s0 = inlined_call_operand.hbm [shape: bf16[2,16,128], index: 0, kind: input, shape index: {}]
  %s1 = inlined_call_operand.hbm [shape: bf16[384,128], index: 1, kind: input, shape index: {}]
  %s2 = inlined_call_operand.vmem [shape: f32[1,128], index: 2, kind: input, shape index: {}]
  %s3 = inlined_call_operand.hbm [shape: bf16[384,128], index: 3, kind: input, shape index: {}]
  %s4 = inlined_call_operand.vmem [shape: f32[1,128], index: 4, kind: input, shape index: {}]
  %s5 = inlined_call_operand.hbm [shape: bf16[2,16,128], index: 5, kind: output, shape index: {}]
  %s6 = sld [smem:[#allocation0]]
  $region42: #{tpu_custom_call.1} parent=0
    _
  %s8 = ssub.s32 1, %s6
  %s9 = scalar_select 0, %s8, %s6
  $region1: #{tpu_custom_call.1} parent=0
    #allocation4 [shape = 'u8[8192]{0}', space=vmem, size = 0x2000, scoped, tag = 'input window, operand 0, single buffered']
    #allocation5 [shape = 's32[1]{0}', space=sflag, size = 0x4, scoped, tag = 'scoped memory for tpu_custom_call.1']
    #allocation6 [shape = 's32[1]{0}', space=sflag, size = 0x4, scoped, tag = 'scoped memory for tpu_custom_call.1']
    #allocation7 [shape = 'u8[98304]{0}', space=vmem, size = 0x18000, scoped, tag = 'input window, operand 1, single buffered']
    #allocation8 [shape = 's32[1]{0}', space=sflag, size = 0x4, scoped, tag = 'scoped memory for tpu_custom_call.1']
    #allocation9 [shape = 'u8[98304]{0}', space=vmem, size = 0x18000, scoped, tag = 'input window, operand 3, single buffered']
    #allocation10 [shape = 'u8[8192]{0}', space=vmem, size = 0x2000, scoped, tag = 'output window, operand 0, single buffered']
    %10 = vsyncpa [#allocation5], 0
    %11 = vsyncpa [#allocation8], 0
    %12 = vsyncpa [#allocation6], 0
    // Predicated region
    $region2: #{tpu_custom_call.1} parent=1 // pred_check
      _
    $region3: #{tpu_custom_call.1} parent=1 // pred_check_branch
      %14 = sbr.rel (0) target = $region5
    $region4: #{tpu_custom_call.1} parent=1 // pred_region
      %s16 = ssub.s32 256, 256
      %17 = vsyncadd [#allocation5], %s16
      %s18 = sshll.u32 [#allocation4], 4
      %s19 = int_to_ptr.vmem [resolvable:$true] %s18
      %24 = dma.hbm_to_vmem [thread:$0]  %s0, 256, %s19, [#allocation5], 64, 64, 4
    $region5: #{tpu_custom_call.1} parent=1 // pred_fallthru
      _
    // Predicated region
    $region6: #{tpu_custom_call.1} parent=1 // pred_check
      _
    $region7: #{tpu_custom_call.1} parent=1 // pred_check_branch
      %26 = sbr.rel (0) target = $region9
    $region8: #{tpu_custom_call.1} parent=1 // pred_region
      %s28 = ssub.s32 3072, 3072
      %29 = vsyncadd [#allocation8], %s28
      %s30 = sshll.u32 [#allocation7], 4
      %s31 = int_to_ptr.vmem [resolvable:$true] %s30
      %36 = dma.hbm_to_vmem [thread:$0]  %s1, 3072, %s31, [#allocation8], 64, 64, 4
    $region9: #{tpu_custom_call.1} parent=1 // pred_fallthru
      _
    // Predicated region
    $region10: #{tpu_custom_call.1} parent=1 // pred_check
      _
    $region11: #{tpu_custom_call.1} parent=1 // pred_check_branch
      %38 = sbr.rel (0) target = $region13
    $region12: #{tpu_custom_call.1} parent=1 // pred_region
      _
    $region13: #{tpu_custom_call.1} parent=1 // pred_fallthru
      _
    // Predicated region
    $region14: #{tpu_custom_call.1} parent=1 // pred_check
      _
    $region15: #{tpu_custom_call.1} parent=1 // pred_check_branch
      %40 = sbr.rel (0) target = $region17
    $region16: #{tpu_custom_call.1} parent=1 // pred_region
      %s42 = ssub.s32 3072, 3072
      %43 = vsyncadd [#allocation8], %s42
      %s44 = sshll.u32 [#allocation9], 4
      %s45 = int_to_ptr.vmem [resolvable:$true] %s44
      %50 = dma.hbm_to_vmem [thread:$0]  %s3, 3072, %s45, [#allocation8], 64, 64, 4
    $region17: #{tpu_custom_call.1} parent=1 // pred_fallthru
      _
    // Predicated region
    $region18: #{tpu_custom_call.1} parent=1 // pred_check
      _
    $region19: #{tpu_custom_call.1} parent=1 // pred_check_branch
      %52 = sbr.rel (0) target = $region21
    $region20: #{tpu_custom_call.1} parent=1 // pred_region
      _
    $region21: #{tpu_custom_call.1} parent=1 // pred_fallthru
      _
    // Predicated region
    $region22: #{tpu_custom_call.1} parent=1 // pred_check
      _
    $region23: #{tpu_custom_call.1} parent=1 // pred_check_branch
      %54 = sbr.rel (0) target = $region25
    $region24: #{tpu_custom_call.1} parent=1 // pred_region
      %55 = dma.done [#allocation5], 256
    $region25: #{tpu_custom_call.1} parent=1 // pred_fallthru
      _
    // Predicated region
    $region26: #{tpu_custom_call.1} parent=1 // pred_check
      _
    $region27: #{tpu_custom_call.1} parent=1 // pred_check_branch
      %57 = sbr.rel (0) target = $region29
    $region28: #{tpu_custom_call.1} parent=1 // pred_region
      %58 = dma.done [#allocation8], 3072
    $region29: #{tpu_custom_call.1} parent=1 // pred_fallthru
      _
    // Predicated region
    $region30: #{tpu_custom_call.1} parent=1 // pred_check
      _
    $region31: #{tpu_custom_call.1} parent=1 // pred_check_branch
      %60 = sbr.rel (0) target = $region33
    $region32: #{tpu_custom_call.1} parent=1 // pred_region
      %61 = dma.done [#allocation8], 3072
    $region33: #{tpu_custom_call.1} parent=1 // pred_fallthru
      _
    %vm63 = vcmask 1040384
    %vm64 = vsmask.f32 256
    %vm65 = vmand %vm63, %vm64
    %v66 = vld [vmem:[#allocation2] sm:$0x1]
    %v67 = vsel %vm65, 0, %v66
    %68 = vst [vmem:[#allocation2] sm:$0x1] %v67
    %v69 = vld [vmem:[#allocation2 + $0xc] sm:$0x1]
    %v70 = vsel %vm65, 0, %v69
    %71 = vst [vmem:[#allocation2 + $0xc] sm:$0x1] %v70
    %vm72 = vsmask.f32 7938
    %vm73 = vmand %vm63, %vm72
    %v74 = vld [vmem:[#allocation2 + $0x8] sm:$0x1]
    %v75 = vsel %vm73, 0, %v74
    %76 = vst [vmem:[#allocation2 + $0x8] sm:$0x1] %v75
    %v77 = vld [vmem:[#allocation2 + $0x14] sm:$0x1]
    %v78 = vsel %vm73, 0, %v77
    %79 = vst [vmem:[#allocation2 + $0x14] sm:$0x1] %v78
    %v80 = vld [vmem:[#allocation3] sm:$0x1]
    %v81 = vsel %vm65, 0, %v80
    %82 = vst [vmem:[#allocation3] sm:$0x1] %v81
    %v83 = vld [vmem:[#allocation3 + $0xc] sm:$0x1]
    %v84 = vsel %vm65, 0, %v83
    %85 = vst [vmem:[#allocation3 + $0xc] sm:$0x1] %v84
    %v86 = vld [vmem:[#allocation3 + $0x8] sm:$0x1]
    %v87 = vsel %vm73, 0, %v86
    %88 = vst [vmem:[#allocation3 + $0x8] sm:$0x1] %v87
    %v89 = vld [vmem:[#allocation3 + $0x14] sm:$0x1]
    %v90 = vsel %vm73, 0, %v89
    %91 = vst [vmem:[#allocation3 + $0x14] sm:$0x1] %v90
    %v92 = vld [vmem:[#allocation4] sm:$0xf]
    %v93 = vld [vmem:[#allocation4 + $0x4] sm:$0xf]
    %v94 = vld [vmem:[#allocation4 + $0x8] sm:$0xf]
    %v95 = vld [vmem:[#allocation4 + $0xc] sm:$0xf]
    %vm96 = vsmask.f32 4368
    %vm97 = vmor %vm64, %vm96
    %v99 = vshrl.u32 %v92, 16
    %v101 = vrot.slane %v99, 7
    %v102 = vshll.u32 %v92, 16
    %v104 = vor.u32 %v101, %v102
    %v105 = vrot.slane %v101, 4
    %v107 = vshrl.u32 %v93, 16
    %v109 = vrot.slane %v107, 7
    %v110 = vshll.u32 %v93, 16
    %v112 = vor.u32 %v109, %v110
    %v113 = vsel %vm97, %v105, %v112
    %v114 = vrot.slane %v109, 4
    %v116 = vshrl.u32 %v94, 16
    %v118 = vrot.slane %v116, 7
    %v119 = vshll.u32 %v94, 16
    %v121 = vor.u32 %v118, %v119
    %v122 = vrot.slane %v118, 4
    %v124 = vshrl.u32 %v95, 16
    %v126 = vrot.slane %v124, 7
    %v127 = vshll.u32 %v95, 16
    %v129 = vor.u32 %v126, %v127
    %v130 = vsel %vm97, %v122, %v129
    %v131 = vrot.slane %v126, 4
    %vm138 = vcmask 1043456
    %vm139 = vmand %vm138, %vm72
    %v140 = vld [vmem:[#allocation2] sm:$0xf]
    %v141 = vsel %vm139, %v104, %v140
    %142 = vst [vmem:[#allocation2] sm:$0xf] %v141
    %143 = vst [vmem:[#allocation2 + $0x4] sm:$0xf] %v113
    %v144 = vld [vmem:[#allocation2 + $0x8] sm:$0x1]
    %v145 = vsel %vm65, %v114, %v144
    %146 = vst [vmem:[#allocation2 + $0x8] sm:$0x1] %v145
    %v147 = vld [vmem:[#allocation2 + $0xc] sm:$0xf]
    %v148 = vsel %vm139, %v121, %v147
    %149 = vst [vmem:[#allocation2 + $0xc] sm:$0xf] %v148
    %150 = vst [vmem:[#allocation2 + $0x10] sm:$0xf] %v130
    %v151 = vld [vmem:[#allocation2 + $0x14] sm:$0x1]
    %v152 = vsel %vm65, %v131, %v151
    %153 = vst [vmem:[#allocation2 + $0x14] sm:$0x1] %v152
    %v154 = vld [vmem:[#allocation2] sm:$0xf]
    %v155 = vld [vmem:[#allocation2 + $0x4] sm:$0xf]
    %v156 = vld [vmem:[#allocation2 + $0xc] sm:$0xf]
    %v157 = vld [vmem:[#allocation2 + $0x10] sm:$0xf]
    %v158 = vld [vmem:[#allocation2] sm:$0xe]
    %v159 = vld [vmem:[#allocation2 + $0x8] sm:$0x1]
    %v160 = vld [vmem:[#allocation2 + $0xc] sm:$0xe]
    %v161 = vld [vmem:[#allocation2 + $0x14] sm:$0x1]
    %vm168 = vcmask 1042432
    %vm169 = vcmask 1046532
    %vm170 = vmor %vm168, %vm169
    %v171 = vrot.slane %v158, 5
    %v172 = vrot.slane %v171, 4
    %v173 = vrot.slane %v155, 5
    %v174 = vsel %vm170, %v172, %v173
    %v175 = vrot.slane %v173, 4
    %v176 = vrot.slane %v159, 5
    %v177 = vsel %vm170, %v175, %v176
    %v178 = vrot.slane %v160, 5
    %v179 = vrot.slane %v178, 4
    %v180 = vrot.slane %v157, 5
    %v181 = vsel %vm170, %v179, %v180
    %v182 = vrot.slane %v180, 4
    %v183 = vrot.slane %v161, 5
    %v184 = vsel %vm170, %v182, %v183
    %v187 = vunpack.c.l.b16 %v154
    %v188 = vunpack.c.l.b16 %v155
    %v189 = vunpack.c.l.b16 %v156
    %v190 = vunpack.c.l.b16 %v157
    %v191 = vpack.c.b16 %v188, %v187
    %v192 = vpack.c.b16 %v190, %v189
    %v199 = vunpack.c.l.b16 %v92
    %v200 = vunpack.c.l.b16 %v93
    %v201 = vunpack.c.l.b16 %v94
    %v202 = vunpack.c.l.b16 %v95
    %v203 = vpack.c.b16 %v200, %v199
    %v204 = vpack.c.b16 %v202, %v201
    %v207 = vunpack.c.l.b16 %v174
    %v208 = vunpack.c.l.b16 %v177
    %v209 = vunpack.c.l.b16 %v181
    %v210 = vunpack.c.l.b16 %v184
    %v211 = vpack.c.b16 %v208, %v207
    %v212 = vpack.c.b16 %v210, %v209
    %v215 = vld [vmem:[#allocation7] sm:$0xf]
    %v216 = vld [vmem:[#allocation7 + $0x4] sm:$0xf]
    %v217 = vld [vmem:[#allocation7 + $0x8] sm:$0xf]
    %v218 = vld [vmem:[#allocation7 + $0xc] sm:$0xf]
    %v219 = vld [vmem:[#allocation7 + $0x10] sm:$0xf]
    %v220 = vld [vmem:[#allocation7 + $0x14] sm:$0xf]
    %v221 = vld [vmem:[#allocation7 + $0x18] sm:$0xf]
    %v222 = vld [vmem:[#allocation7 + $0x1c] sm:$0xf]
    %v223 = vld [vmem:[#allocation7 + $0x20] sm:$0xf]
    %v224 = vld [vmem:[#allocation7 + $0x24] sm:$0xf]
    %v225 = vld [vmem:[#allocation7 + $0x28] sm:$0xf]
    %v226 = vld [vmem:[#allocation7 + $0x2c] sm:$0xf]
    %v227 = vld [vmem:[#allocation7 + $0x30] sm:$0xf]
    %v228 = vld [vmem:[#allocation7 + $0x34] sm:$0xf]
    %v229 = vld [vmem:[#allocation7 + $0x38] sm:$0xf]
    %v230 = vld [vmem:[#allocation7 + $0x3c] sm:$0xf]
    %v231 = vld [vmem:[#allocation7 + $0x40] sm:$0xf]
    %v232 = vld [vmem:[#allocation7 + $0x44] sm:$0xf]
    %v233 = vld [vmem:[#allocation7 + $0x48] sm:$0xf]
    %v234 = vld [vmem:[#allocation7 + $0x4c] sm:$0xf]
    %v235 = vld [vmem:[#allocation7 + $0x50] sm:$0xf]
    %v236 = vld [vmem:[#allocation7 + $0x54] sm:$0xf]
    %v237 = vld [vmem:[#allocation7 + $0x58] sm:$0xf]
    %v238 = vld [vmem:[#allocation7 + $0x5c] sm:$0xf]
    %v239 = vld [vmem:[#allocation7 + $0x60] sm:$0xf]
    %v240 = vld [vmem:[#allocation7 + $0x64] sm:$0xf]
    %v241 = vld [vmem:[#allocation7 + $0x68] sm:$0xf]
    %v242 = vld [vmem:[#allocation7 + $0x6c] sm:$0xf]
    %v243 = vld [vmem:[#allocation7 + $0x70] sm:$0xf]
    %v244 = vld [vmem:[#allocation7 + $0x74] sm:$0xf]
    %v245 = vld [vmem:[#allocation7 + $0x78] sm:$0xf]
    %v246 = vld [vmem:[#allocation7 + $0x7c] sm:$0xf]
    %v247 = vld [vmem:[#allocation7 + $0x80] sm:$0xf]
    %v248 = vld [vmem:[#allocation7 + $0x84] sm:$0xf]
    %v249 = vld [vmem:[#allocation7 + $0x88] sm:$0xf]
    %v250 = vld [vmem:[#allocation7 + $0x8c] sm:$0xf]
    %v251 = vld [vmem:[#allocation7 + $0x90] sm:$0xf]
    %v252 = vld [vmem:[#allocation7 + $0x94] sm:$0xf]
    %v253 = vld [vmem:[#allocation7 + $0x98] sm:$0xf]
    %v254 = vld [vmem:[#allocation7 + $0x9c] sm:$0xf]
    %v255 = vld [vmem:[#allocation7 + $0xa0] sm:$0xf]
    %v256 = vld [vmem:[#allocation7 + $0xa4] sm:$0xf]
    %v257 = vld [vmem:[#allocation7 + $0xa8] sm:$0xf]
    %v258 = vld [vmem:[#allocation7 + $0xac] sm:$0xf]
    %v259 = vld [vmem:[#allocation7 + $0xb0] sm:$0xf]
    %v260 = vld [vmem:[#allocation7 + $0xb4] sm:$0xf]
    %v261 = vld [vmem:[#allocation7 + $0xb8] sm:$0xf]
    %v262 = vld [vmem:[#allocation7 + $0xbc] sm:$0xf]
    %v263 = vld [vmem:[%s2] sm:$0x1]
    %v265 = vlaneseq
    %v266 = vshrl.u32 %v265, 7
    %v267 = vsub.s32 0, %v266
    %v268 = vrot.slane %v263, %v267
    %v318 = vunpack.c.l.b16 %v215
    %v319 = vunpack.c.l.b16 %v216
    %v320 = vunpack.c.l.b16 %v217
    %v321 = vunpack.c.l.b16 %v218
    %v322 = vunpack.c.l.b16 %v219
    %v323 = vunpack.c.l.b16 %v220
    %v324 = vunpack.c.l.b16 %v221
    %v325 = vunpack.c.l.b16 %v222
    %v326 = vunpack.c.l.b16 %v223
    %v327 = vunpack.c.l.b16 %v224
    %v328 = vunpack.c.l.b16 %v225
    %v329 = vunpack.c.l.b16 %v226
    %v330 = vunpack.c.l.b16 %v227
    %v331 = vunpack.c.l.b16 %v228
    %v332 = vunpack.c.l.b16 %v229
    %v333 = vunpack.c.l.b16 %v230
    %v334 = vunpack.c.l.b16 %v231
    %v335 = vunpack.c.l.b16 %v232
    %v336 = vunpack.c.l.b16 %v233
    %v337 = vunpack.c.l.b16 %v234
    %v338 = vunpack.c.l.b16 %v235
    %v339 = vunpack.c.l.b16 %v236
    %v340 = vunpack.c.l.b16 %v237
    %v341 = vunpack.c.l.b16 %v238
    %v342 = vunpack.c.l.b16 %v239
    %v343 = vunpack.c.l.b16 %v240
    %v344 = vunpack.c.l.b16 %v241
    %v345 = vunpack.c.l.b16 %v242
    %v346 = vunpack.c.l.b16 %v243
    %v347 = vunpack.c.l.b16 %v244
    %v348 = vunpack.c.l.b16 %v245
    %v349 = vunpack.c.l.b16 %v246
    %v350 = vunpack.c.l.b16 %v247
    %v351 = vunpack.c.l.b16 %v248
    %v352 = vunpack.c.l.b16 %v249
    %v353 = vunpack.c.l.b16 %v250
    %v354 = vunpack.c.l.b16 %v251
    %v355 = vunpack.c.l.b16 %v252
    %v356 = vunpack.c.l.b16 %v253
    %v357 = vunpack.c.l.b16 %v254
    %v358 = vunpack.c.l.b16 %v255
    %v359 = vunpack.c.l.b16 %v256
    %v360 = vunpack.c.l.b16 %v257
    %v361 = vunpack.c.l.b16 %v258
    %v362 = vunpack.c.l.b16 %v259
    %v363 = vunpack.c.l.b16 %v260
    %v364 = vunpack.c.l.b16 %v261
    %v365 = vunpack.c.l.b16 %v262
    %v366 = vpack.c.b16 %v319, %v318
    %v367 = vpack.c.b16 %v321, %v320
    %v368 = vpack.c.b16 %v323, %v322
    %v369 = vpack.c.b16 %v325, %v324
    %v370 = vpack.c.b16 %v327, %v326
    %v371 = vpack.c.b16 %v329, %v328
    %v372 = vpack.c.b16 %v331, %v330
    %v373 = vpack.c.b16 %v333, %v332
    %v374 = vpack.c.b16 %v335, %v334
    %v375 = vpack.c.b16 %v337, %v336
    %v376 = vpack.c.b16 %v339, %v338
    %v377 = vpack.c.b16 %v341, %v340
    %v378 = vpack.c.b16 %v343, %v342
    %v379 = vpack.c.b16 %v345, %v344
    %v380 = vpack.c.b16 %v347, %v346
    %v381 = vpack.c.b16 %v349, %v348
    %v382 = vpack.c.b16 %v351, %v350
    %v383 = vpack.c.b16 %v353, %v352
    %v384 = vpack.c.b16 %v355, %v354
    %v385 = vpack.c.b16 %v357, %v356
    %v386 = vpack.c.b16 %v359, %v358
    %v387 = vpack.c.b16 %v361, %v360
    %v388 = vpack.c.b16 %v363, %v362
    %v389 = vpack.c.b16 %v365, %v364
    %414 = vmatprep.subr.bf16.mxu0 0
    %415 = vmatpush1.bf16.msra.mxu0 %v366
    %416 = vmatprep.subr.bf16.mxu0 0
    %417 = vmatpush1.bf16.msra.mxu0 %v367
    %418 = vmatprep.subr.bf16.mxu0 0
    %419 = vmatpush1.bf16.msra.mxu0 %v368
    %420 = vmatprep.subr.bf16.mxu0 0
    %421 = vmatpush1.bf16.msra.mxu0 %v369
    %422 = vmatprep.subr.bf16.mxu0 0
    %423 = vmatpush1.bf16.msra.mxu0 %v370
    %424 = vmatprep.subr.bf16.mxu0 0
    %425 = vmatpush1.bf16.msra.mxu0 %v371
    %426 = vmatprep.subr.bf16.mxu0 0
    %427 = vmatpush1.bf16.msra.mxu0 %v372
    %428 = vmatprep.subr.bf16.mxu0 0
    %429 = vmatpush1.bf16.msra.mxu0 %v373
    %430 = vmatprep.subr.bf16.mxu0 0
    %431 = vmatpush1.bf16.msra.mxu0 %v374
    %432 = vmatprep.subr.bf16.mxu0 0
    %433 = vmatpush1.bf16.msra.mxu0 %v375
    %434 = vmatprep.subr.bf16.mxu0 0
    %435 = vmatpush1.bf16.msra.mxu0 %v376
    %436 = vmatprep.subr.bf16.mxu0 0
    %437 = vmatpush1.bf16.msra.mxu0 %v377
    %438 = vmatprep.subr.bf16.mxu0 0
    %439 = vmatpush1.bf16.msra.mxu0 %v378
    %440 = vmatprep.subr.bf16.mxu0 0
    %441 = vmatpush1.bf16.msra.mxu0 %v379
    %442 = vmatprep.subr.bf16.mxu0 0
    %443 = vmatpush1.bf16.msra.mxu0 %v380
    %444 = vmatprep.subr.bf16.mxu0 0
    %445 = vmatpush1.bf16.msra.mxu0 %v381
    %446 = vmatprep.mubr.bf16.mxu0 %v203
    %447 = vmatmul.mubr.bf16.gmra.mrb[0].mxu0 %v191
    %v448 = vpop.f32.mrb[0].mxu0
    %v449 = vadd.f32 %v268, %v448
    %v450 = vpop.f32.mrb[0].mxu0
    %v451 = vpop.f32.mrb[0].mxu0
    %v452 = vadd.f32 %v268, %v451
    %v453 = vpop.f32.mrb[0].mxu0
    %454 = vmatprep.mubr.bf16.mxu0 %v204
    %455 = vmatmul.mubr.bf16.gmra.mrb[0].mxu0 %v192
    %v456 = vpop.f32.mrb[0].mxu0
    %v457 = vadd.f32 %v268, %v456
    %v458 = vpop.f32.mrb[0].mxu0
    %v459 = vpop.f32.mrb[0].mxu0
    %v460 = vadd.f32 %v268, %v459
    %v461 = vpop.f32.mrb[0].mxu0
    %462 = vdwg.mxu0
    %463 = vmatprep.subr.bf16.mxu0 0
    %464 = vmatpush1.bf16.msra.mxu0 %v382
    %465 = vmatprep.subr.bf16.mxu0 0
    %466 = vmatpush1.bf16.msra.mxu0 %v383
    %467 = vmatprep.subr.bf16.mxu0 0
    %468 = vmatpush1.bf16.msra.mxu0 %v384
    %469 = vmatprep.subr.bf16.mxu0 0
    %470 = vmatpush1.bf16.msra.mxu0 %v385
    %471 = vmatprep.subr.bf16.mxu0 0
    %472 = vmatpush1.bf16.msra.mxu0 %v386
    %473 = vmatprep.subr.bf16.mxu0 0
    %474 = vmatpush1.bf16.msra.mxu0 %v387
    %475 = vmatprep.subr.bf16.mxu0 0
    %476 = vmatpush1.bf16.msra.mxu0 %v388
    %477 = vmatprep.subr.bf16.mxu0 0
    %478 = vmatpush1.bf16.msra.mxu0 %v389
    %479 = vmatprep.subr.bf16.mxu0 0
    %480 = vmatpush1.bf16.msra.mxu0 0
    %481 = vmatprep.subr.bf16.mxu0 0
    %482 = vmatpush1.bf16.msra.mxu0 0
    %483 = vmatprep.subr.bf16.mxu0 0
    %484 = vmatpush1.bf16.msra.mxu0 0
    %485 = vmatprep.subr.bf16.mxu0 0
    %486 = vmatpush1.bf16.msra.mxu0 0
    %487 = vmatprep.subr.bf16.mxu0 0
    %488 = vmatpush1.bf16.msra.mxu0 0
    %489 = vmatprep.subr.bf16.mxu0 0
    %490 = vmatpush1.bf16.msra.mxu0 0
    %491 = vmatprep.subr.bf16.mxu0 0
    %492 = vmatpush1.bf16.msra.mxu0 0
    %493 = vmatprep.subr.bf16.mxu0 0
    %494 = vmatpush1.bf16.msra.mxu0 0
    %495 = vmatprep.mubr.bf16.mxu0 0
    %496 = vmatmul.mubr.bf16.gmra.mrb[0].mxu0 %v211
    %v497 = vpop.f32.mrb[0].mxu0
    %v498 = vadd.f32 %v449, %v497
    %v499 = vpop.f32.mrb[0].mxu0
    %v500 = vpop.f32.mrb[0].mxu0
    %v501 = vadd.f32 %v452, %v500
    %v502 = vpop.f32.mrb[0].mxu0
    %503 = vmatprep.mubr.bf16.mxu0 0
    %504 = vmatmul.mubr.bf16.gmra.mrb[0].mxu0 %v212
    %v505 = vpop.f32.mrb[0].mxu0
    %v506 = vadd.f32 %v457, %v505
    %v507 = vpop.f32.mrb[0].mxu0
    %v508 = vpop.f32.mrb[0].mxu0
    %v509 = vadd.f32 %v460, %v508
    %v510 = vpop.f32.mrb[0].mxu0
    %511 = vdwg.mxu0
    %v512 = vmax.f32 %v498, 0.0
    %v513 = vmax.f32 %v501, 0.0
    %v514 = vmax.f32 %v506, 0.0
    %v515 = vmax.f32 %v509, 0.0
    %v516 = vpack.c.bf16 %v513, %v512
    %v517 = vpack.c.bf16 %v515, %v514
    %v520 = vunpack.c.l.b16 %v516
    %v521 = vunpack.c.h.b16 %v516
    %v522 = vunpack.c.l.b16 %v517
    %v523 = vunpack.c.h.b16 %v517
    %v524 = vpack.c.b16 %v520, %v520
    %v525 = vpack.c.b16 %v521, %v521
    %v526 = vpack.c.b16 %v522, %v522
    %v527 = vpack.c.b16 %v523, %v523
    %v529 = vshrl.u32 %v524, 16
    %v531 = vrot.slane %v529, 7
    %v532 = vshll.u32 %v524, 16
    %v534 = vor.u32 %v531, %v532
    %v535 = vrot.slane %v531, 4
    %v537 = vshrl.u32 %v525, 16
    %v539 = vrot.slane %v537, 7
    %v540 = vshll.u32 %v525, 16
    %v542 = vor.u32 %v539, %v540
    %v543 = vsel %vm97, %v535, %v542
    %v544 = vrot.slane %v539, 4
    %v546 = vshrl.u32 %v526, 16
    %v548 = vrot.slane %v546, 7
    %v549 = vshll.u32 %v526, 16
    %v551 = vor.u32 %v548, %v549
    %v552 = vrot.slane %v548, 4
    %v554 = vshrl.u32 %v527, 16
    %v556 = vrot.slane %v554, 7
    %v557 = vshll.u32 %v527, 16
    %v559 = vor.u32 %v556, %v557
    %v560 = vsel %vm97, %v552, %v559
    %v561 = vrot.slane %v556, 4
    %v568 = vld [vmem:[#allocation3] sm:$0xf]
    %v569 = vsel %vm139, %v534, %v568
    %570 = vst [vmem:[#allocation3] sm:$0xf] %v569
    %571 = vst [vmem:[#allocation3 + $0x4] sm:$0xf] %v543
    %v572 = vld [vmem:[#allocation3 + $0x8] sm:$0x1]
    %v573 = vsel %vm65, %v544, %v572
    %574 = vst [vmem:[#allocation3 + $0x8] sm:$0x1] %v573
    %v575 = vld [vmem:[#allocation3 + $0xc] sm:$0xf]
    %v576 = vsel %vm139, %v551, %v575
    %577 = vst [vmem:[#allocation3 + $0xc] sm:$0xf] %v576
    %578 = vst [vmem:[#allocation3 + $0x10] sm:$0xf] %v560
    %v579 = vld [vmem:[#allocation3 + $0x14] sm:$0x1]
    %v580 = vsel %vm65, %v561, %v579
    %581 = vst [vmem:[#allocation3 + $0x14] sm:$0x1] %v580
    %v582 = vld [vmem:[#allocation3] sm:$0xf]
    %v583 = vld [vmem:[#allocation3 + $0x4] sm:$0xf]
    %v584 = vld [vmem:[#allocation3 + $0xc] sm:$0xf]
    %v585 = vld [vmem:[#allocation3 + $0x10] sm:$0xf]
    %v586 = vld [vmem:[#allocation3] sm:$0xe]
    %v587 = vld [vmem:[#allocation3 + $0x8] sm:$0x1]
    %v588 = vld [vmem:[#allocation3 + $0xc] sm:$0xe]
    %v589 = vld [vmem:[#allocation3 + $0x14] sm:$0x1]
    %v596 = vrot.slane %v586, 5
    %v597 = vrot.slane %v596, 4
    %v598 = vrot.slane %v583, 5
    %v599 = vsel %vm170, %v597, %v598
    %v600 = vrot.slane %v598, 4
    %v601 = vrot.slane %v587, 5
    %v602 = vsel %vm170, %v600, %v601
    %v603 = vrot.slane %v588, 5
    %v604 = vrot.slane %v603, 4
    %v605 = vrot.slane %v585, 5
    %v606 = vsel %vm170, %v604, %v605
    %v607 = vrot.slane %v605, 4
    %v608 = vrot.slane %v589, 5
    %v609 = vsel %vm170, %v607, %v608
    %v612 = vunpack.c.l.b16 %v582
    %v613 = vunpack.c.l.b16 %v583
    %v614 = vunpack.c.l.b16 %v584
    %v615 = vunpack.c.l.b16 %v585
    %v616 = vpack.c.b16 %v613, %v612
    %v617 = vpack.c.b16 %v615, %v614
    %v620 = vunpack.c.l.b16 %v599
    %v621 = vunpack.c.l.b16 %v602
    %v622 = vunpack.c.l.b16 %v606
    %v623 = vunpack.c.l.b16 %v609
    %v624 = vpack.c.b16 %v621, %v620
    %v625 = vpack.c.b16 %v623, %v622
    %v628 = vld [vmem:[#allocation9] sm:$0xf]
    %v629 = vld [vmem:[#allocation9 + $0x4] sm:$0xf]
    %v630 = vld [vmem:[#allocation9 + $0x8] sm:$0xf]
    %v631 = vld [vmem:[#allocation9 + $0xc] sm:$0xf]
    %v632 = vld [vmem:[#allocation9 + $0x10] sm:$0xf]
    %v633 = vld [vmem:[#allocation9 + $0x14] sm:$0xf]
    %v634 = vld [vmem:[#allocation9 + $0x18] sm:$0xf]
    %v635 = vld [vmem:[#allocation9 + $0x1c] sm:$0xf]
    %v636 = vld [vmem:[#allocation9 + $0x20] sm:$0xf]
    %v637 = vld [vmem:[#allocation9 + $0x24] sm:$0xf]
    %v638 = vld [vmem:[#allocation9 + $0x28] sm:$0xf]
    %v639 = vld [vmem:[#allocation9 + $0x2c] sm:$0xf]
    %v640 = vld [vmem:[#allocation9 + $0x30] sm:$0xf]
    %v641 = vld [vmem:[#allocation9 + $0x34] sm:$0xf]
    %v642 = vld [vmem:[#allocation9 + $0x38] sm:$0xf]
    %v643 = vld [vmem:[#allocation9 + $0x3c] sm:$0xf]
    %v644 = vld [vmem:[#allocation9 + $0x40] sm:$0xf]
    %v645 = vld [vmem:[#allocation9 + $0x44] sm:$0xf]
    %v646 = vld [vmem:[#allocation9 + $0x48] sm:$0xf]
    %v647 = vld [vmem:[#allocation9 + $0x4c] sm:$0xf]
    %v648 = vld [vmem:[#allocation9 + $0x50] sm:$0xf]
    %v649 = vld [vmem:[#allocation9 + $0x54] sm:$0xf]
    %v650 = vld [vmem:[#allocation9 + $0x58] sm:$0xf]
    %v651 = vld [vmem:[#allocation9 + $0x5c] sm:$0xf]
    %v652 = vld [vmem:[#allocation9 + $0x60] sm:$0xf]
    %v653 = vld [vmem:[#allocation9 + $0x64] sm:$0xf]
    %v654 = vld [vmem:[#allocation9 + $0x68] sm:$0xf]
    %v655 = vld [vmem:[#allocation9 + $0x6c] sm:$0xf]
    %v656 = vld [vmem:[#allocation9 + $0x70] sm:$0xf]
    %v657 = vld [vmem:[#allocation9 + $0x74] sm:$0xf]
    %v658 = vld [vmem:[#allocation9 + $0x78] sm:$0xf]
    %v659 = vld [vmem:[#allocation9 + $0x7c] sm:$0xf]
    %v660 = vld [vmem:[#allocation9 + $0x80] sm:$0xf]
    %v661 = vld [vmem:[#allocation9 + $0x84] sm:$0xf]
    %v662 = vld [vmem:[#allocation9 + $0x88] sm:$0xf]
    %v663 = vld [vmem:[#allocation9 + $0x8c] sm:$0xf]
    %v664 = vld [vmem:[#allocation9 + $0x90] sm:$0xf]
    %v665 = vld [vmem:[#allocation9 + $0x94] sm:$0xf]
    %v666 = vld [vmem:[#allocation9 + $0x98] sm:$0xf]
    %v667 = vld [vmem:[#allocation9 + $0x9c] sm:$0xf]
    %v668 = vld [vmem:[#allocation9 + $0xa0] sm:$0xf]
    %v669 = vld [vmem:[#allocation9 + $0xa4] sm:$0xf]
    %v670 = vld [vmem:[#allocation9 + $0xa8] sm:$0xf]
    %v671 = vld [vmem:[#allocation9 + $0xac] sm:$0xf]
    %v672 = vld [vmem:[#allocation9 + $0xb0] sm:$0xf]
    %v673 = vld [vmem:[#allocation9 + $0xb4] sm:$0xf]
    %v674 = vld [vmem:[#allocation9 + $0xb8] sm:$0xf]
    %v675 = vld [vmem:[#allocation9 + $0xbc] sm:$0xf]
    %v676 = vld [vmem:[%s4] sm:$0x1]
    %v678 = vlaneseq
    %v679 = vshrl.u32 %v678, 7
    %v680 = vsub.s32 0, %v679
    %v681 = vrot.slane %v676, %v680
    %v731 = vunpack.c.l.b16 %v628
    %v732 = vunpack.c.l.b16 %v629
    %v733 = vunpack.c.l.b16 %v630
    %v734 = vunpack.c.l.b16 %v631
    %v735 = vunpack.c.l.b16 %v632
    %v736 = vunpack.c.l.b16 %v633
    %v737 = vunpack.c.l.b16 %v634
    %v738 = vunpack.c.l.b16 %v635
    %v739 = vunpack.c.l.b16 %v636
    %v740 = vunpack.c.l.b16 %v637
    %v741 = vunpack.c.l.b16 %v638
    %v742 = vunpack.c.l.b16 %v639
    %v743 = vunpack.c.l.b16 %v640
    %v744 = vunpack.c.l.b16 %v641
    %v745 = vunpack.c.l.b16 %v642
    %v746 = vunpack.c.l.b16 %v643
    %v747 = vunpack.c.l.b16 %v644
    %v748 = vunpack.c.l.b16 %v645
    %v749 = vunpack.c.l.b16 %v646
    %v750 = vunpack.c.l.b16 %v647
    %v751 = vunpack.c.l.b16 %v648
    %v752 = vunpack.c.l.b16 %v649
    %v753 = vunpack.c.l.b16 %v650
    %v754 = vunpack.c.l.b16 %v651
    %v755 = vunpack.c.l.b16 %v652
    %v756 = vunpack.c.l.b16 %v653
    %v757 = vunpack.c.l.b16 %v654
    %v758 = vunpack.c.l.b16 %v655
    %v759 = vunpack.c.l.b16 %v656
    %v760 = vunpack.c.l.b16 %v657
    %v761 = vunpack.c.l.b16 %v658
    %v762 = vunpack.c.l.b16 %v659
    %v763 = vunpack.c.l.b16 %v660
    %v764 = vunpack.c.l.b16 %v661
    %v765 = vunpack.c.l.b16 %v662
    %v766 = vunpack.c.l.b16 %v663
    %v767 = vunpack.c.l.b16 %v664
    %v768 = vunpack.c.l.b16 %v665
    %v769 = vunpack.c.l.b16 %v666
    %v770 = vunpack.c.l.b16 %v667
    %v771 = vunpack.c.l.b16 %v668
    %v772 = vunpack.c.l.b16 %v669
    %v773 = vunpack.c.l.b16 %v670
    %v774 = vunpack.c.l.b16 %v671
    %v775 = vunpack.c.l.b16 %v672
    %v776 = vunpack.c.l.b16 %v673
    %v777 = vunpack.c.l.b16 %v674
    %v778 = vunpack.c.l.b16 %v675
    %v779 = vpack.c.b16 %v732, %v731
    %v780 = vpack.c.b16 %v734, %v733
    %v781 = vpack.c.b16 %v736, %v735
    %v782 = vpack.c.b16 %v738, %v737
    %v783 = vpack.c.b16 %v740, %v739
    %v784 = vpack.c.b16 %v742, %v741
    %v785 = vpack.c.b16 %v744, %v743
    %v786 = vpack.c.b16 %v746, %v745
    %v787 = vpack.c.b16 %v748, %v747
    %v788 = vpack.c.b16 %v750, %v749
    %v789 = vpack.c.b16 %v752, %v751
    %v790 = vpack.c.b16 %v754, %v753
    %v791 = vpack.c.b16 %v756, %v755
    %v792 = vpack.c.b16 %v758, %v757
    %v793 = vpack.c.b16 %v760, %v759
    %v794 = vpack.c.b16 %v762, %v761
    %v795 = vpack.c.b16 %v764, %v763
    %v796 = vpack.c.b16 %v766, %v765
    %v797 = vpack.c.b16 %v768, %v767
    %v798 = vpack.c.b16 %v770, %v769
    %v799 = vpack.c.b16 %v772, %v771
    %v800 = vpack.c.b16 %v774, %v773
    %v801 = vpack.c.b16 %v776, %v775
    %v802 = vpack.c.b16 %v778, %v777
    %827 = vmatprep.subr.bf16.mxu0 0
    %828 = vmatpush1.bf16.msra.mxu0 %v779
    %829 = vmatprep.subr.bf16.mxu0 0
    %830 = vmatpush1.bf16.msra.mxu0 %v780
    %831 = vmatprep.subr.bf16.mxu0 0
    %832 = vmatpush1.bf16.msra.mxu0 %v781
    %833 = vmatprep.subr.bf16.mxu0 0
    %834 = vmatpush1.bf16.msra.mxu0 %v782
    %835 = vmatprep.subr.bf16.mxu0 0
    %836 = vmatpush1.bf16.msra.mxu0 %v783
    %837 = vmatprep.subr.bf16.mxu0 0
    %838 = vmatpush1.bf16.msra.mxu0 %v784
    %839 = vmatprep.subr.bf16.mxu0 0
    %840 = vmatpush1.bf16.msra.mxu0 %v785
    %841 = vmatprep.subr.bf16.mxu0 0
    %842 = vmatpush1.bf16.msra.mxu0 %v786
    %843 = vmatprep.subr.bf16.mxu0 0
    %844 = vmatpush1.bf16.msra.mxu0 %v787
    %845 = vmatprep.subr.bf16.mxu0 0
    %846 = vmatpush1.bf16.msra.mxu0 %v788
    %847 = vmatprep.subr.bf16.mxu0 0
    %848 = vmatpush1.bf16.msra.mxu0 %v789
    %849 = vmatprep.subr.bf16.mxu0 0
    %850 = vmatpush1.bf16.msra.mxu0 %v790
    %851 = vmatprep.subr.bf16.mxu0 0
    %852 = vmatpush1.bf16.msra.mxu0 %v791
    %853 = vmatprep.subr.bf16.mxu0 0
    %854 = vmatpush1.bf16.msra.mxu0 %v792
    %855 = vmatprep.subr.bf16.mxu0 0
    %856 = vmatpush1.bf16.msra.mxu0 %v793
    %857 = vmatprep.subr.bf16.mxu0 0
    %858 = vmatpush1.bf16.msra.mxu0 %v794
    %859 = vmatprep.mubr.bf16.mxu0 %v516
    %860 = vmatmul.mubr.bf16.gmra.mrb[0].mxu0 %v616
    %v861 = vpop.f32.mrb[0].mxu0
    %v862 = vadd.f32 %v681, %v861
    %v863 = vpop.f32.mrb[0].mxu0
    %v864 = vpop.f32.mrb[0].mxu0
    %v865 = vadd.f32 %v681, %v864
    %v866 = vpop.f32.mrb[0].mxu0
    %867 = vmatprep.mubr.bf16.mxu0 %v517
    %868 = vmatmul.mubr.bf16.gmra.mrb[0].mxu0 %v617
    %v869 = vpop.f32.mrb[0].mxu0
    %v870 = vadd.f32 %v681, %v869
    %v871 = vpop.f32.mrb[0].mxu0
    %v872 = vpop.f32.mrb[0].mxu0
    %v873 = vadd.f32 %v681, %v872
    %v874 = vpop.f32.mrb[0].mxu0
    %875 = vdwg.mxu0
    %876 = vmatprep.subr.bf16.mxu0 0
    %877 = vmatpush1.bf16.msra.mxu0 %v795
    %878 = vmatprep.subr.bf16.mxu0 0
    %879 = vmatpush1.bf16.msra.mxu0 %v796
    %880 = vmatprep.subr.bf16.mxu0 0
    %881 = vmatpush1.bf16.msra.mxu0 %v797
    %882 = vmatprep.subr.bf16.mxu0 0
    %883 = vmatpush1.bf16.msra.mxu0 %v798
    %884 = vmatprep.subr.bf16.mxu0 0
    %885 = vmatpush1.bf16.msra.mxu0 %v799
    %886 = vmatprep.subr.bf16.mxu0 0
    %887 = vmatpush1.bf16.msra.mxu0 %v800
    %888 = vmatprep.subr.bf16.mxu0 0
    %889 = vmatpush1.bf16.msra.mxu0 %v801
    %890 = vmatprep.subr.bf16.mxu0 0
    %891 = vmatpush1.bf16.msra.mxu0 %v802
    %892 = vmatprep.subr.bf16.mxu0 0
    %893 = vmatpush1.bf16.msra.mxu0 0
    %894 = vmatprep.subr.bf16.mxu0 0
    %895 = vmatpush1.bf16.msra.mxu0 0
    %896 = vmatprep.subr.bf16.mxu0 0
    %897 = vmatpush1.bf16.msra.mxu0 0
    %898 = vmatprep.subr.bf16.mxu0 0
    %899 = vmatpush1.bf16.msra.mxu0 0
    %900 = vmatprep.subr.bf16.mxu0 0
    %901 = vmatpush1.bf16.msra.mxu0 0
    %902 = vmatprep.subr.bf16.mxu0 0
    %903 = vmatpush1.bf16.msra.mxu0 0
    %904 = vmatprep.subr.bf16.mxu0 0
    %905 = vmatpush1.bf16.msra.mxu0 0
    %906 = vmatprep.subr.bf16.mxu0 0
    %907 = vmatpush1.bf16.msra.mxu0 0
    %908 = vmatprep.mubr.bf16.mxu0 0
    %909 = vmatmul.mubr.bf16.gmra.mrb[0].mxu0 %v624
    %v910 = vpop.f32.mrb[0].mxu0
    %v911 = vadd.f32 %v862, %v910
    %v912 = vpop.f32.mrb[0].mxu0
    %v913 = vpop.f32.mrb[0].mxu0
    %v914 = vadd.f32 %v865, %v913
    %v915 = vpop.f32.mrb[0].mxu0
    %916 = vmatprep.mubr.bf16.mxu0 0
    %917 = vmatmul.mubr.bf16.gmra.mrb[0].mxu0 %v625
    %v918 = vpop.f32.mrb[0].mxu0
    %v919 = vadd.f32 %v870, %v918
    %v920 = vpop.f32.mrb[0].mxu0
    %v921 = vpop.f32.mrb[0].mxu0
    %v922 = vadd.f32 %v873, %v921
    %v923 = vpop.f32.mrb[0].mxu0
    %924 = vdwg.mxu0
    %v925 = vunpack.c.l.bf16 %v92
    %v926 = vunpack.c.l.bf16 %v93
    %v927 = vunpack.c.l.bf16 %v94
    %v928 = vunpack.c.l.bf16 %v95
    %v929 = vadd.f32 %v911, %v925
    %v930 = vadd.f32 %v914, %v926
    %v931 = vadd.f32 %v919, %v927
    %v932 = vadd.f32 %v922, %v928
    %v933 = vmax.f32 %v929, 0.0
    %v934 = vmax.f32 %v930, 0.0
    %v935 = vmax.f32 %v931, 0.0
    %v936 = vmax.f32 %v932, 0.0
    %v937 = vpack.c.bf16 %v934, %v933
    %v938 = vpack.c.bf16 %v936, %v935
    %v941 = vunpack.c.l.b16 %v937
    %v942 = vunpack.c.h.b16 %v937
    %v943 = vunpack.c.l.b16 %v938
    %v944 = vunpack.c.h.b16 %v938
    %v945 = vpack.c.b16 %v941, %v941
    %v946 = vpack.c.b16 %v942, %v942
    %v947 = vpack.c.b16 %v943, %v943
    %v948 = vpack.c.b16 %v944, %v944
    %953 = vst [vmem:[#allocation10] sm:$0xf] %v945
    %954 = vst [vmem:[#allocation10 + $0x4] sm:$0xf] %v946
    %955 = vst [vmem:[#allocation10 + $0x8] sm:$0xf] %v947
    %956 = vst [vmem:[#allocation10 + $0xc] sm:$0xf] %v948
    // Predicated region
    $region34: #{tpu_custom_call.1} parent=1 // pred_check
      _
    $region35: #{tpu_custom_call.1} parent=1 // pred_check_branch
      %958 = sbr.rel (0) target = $region37
    $region36: #{tpu_custom_call.1} parent=1 // pred_region
      %s960 = ssub.s32 256, 256
      %961 = vsyncadd [#allocation6], %s960
      %s962 = sshll.u32 [#allocation10], 4
      %s963 = int_to_ptr.vmem [resolvable:$true] %s962
      %968 = dma.vmem_to_hbm [thread:$0]  %s963, 256, %s5, [#allocation6], 64, 64, 4
    $region37: #{tpu_custom_call.1} parent=1 // pred_fallthru
      _
    // Predicated region
    $region38: #{tpu_custom_call.1} parent=1 // pred_check
      _
    $region39: #{tpu_custom_call.1} parent=1 // pred_check_branch
      %970 = sbr.rel (0) target = $region41
    $region40: #{tpu_custom_call.1} parent=1 // pred_region
      %971 = dma.done [#allocation6], 256
    $region41: #{tpu_custom_call.1} parent=1 // pred_fallthru
      _
    %972 = vsyncpa [#allocation5], 1
    %973 = vsyncpa [#allocation8], 1
    %974 = vsyncpa [#allocation6], 1

</llo_original>
